<compile_context>
chip_gen: v5e
topology: v5e:2x2
jax: 0.10.0
libtpu: 0.0.40
codegen_flags: <defaults>
</compile_context>

<pallas_src>
import functools

import jax
import jax.numpy as jnp
from jax.experimental import pallas as pl
from jax.experimental.pallas import tpu as pltpu

BN_EPS = 1e-5
LANE = 128


def _round_up(n, m=LANE):
    return ((n + m - 1) // m) * m


# -----------------------------------------------------------------------------
# Kernel
# -----------------------------------------------------------------------------
def _make_net_kernel(pad_dims):
    """pad_dims = (l1p, l2p, l3p, out_p), all multiples of 128."""
    l1p, l2p, l3p, out_p = pad_dims
    offs = (0, l1p, l1p + l2p, l1p + l2p + l3p)  # 128-aligned lane offsets

    def kernel(x_ref, w1_ref, w2_ref, w3_ref, w4_ref, aff_ref, o_ref):
        inv_b = 1.0 / x_ref.shape[0]  # static

        def layer(h_bf, w_ref, off, n):
            # Static, 128-aligned slices of the packed affine operand: free views.
            gamma = aff_ref[0:1, off:off + n]
            beta = aff_ref[1:2, off:off + n]

            # MXU matmul, f32 accumulation.  No linear bias: it cancels under
            # training-mode BatchNorm (mean subtraction).
            h = jnp.dot(h_bf, w_ref[...], preferred_element_type=jnp.float32)

            # Single-pass batch statistics: var = E[h^2] - mean^2, clamped >= 0.
            mean = jnp.sum(h, axis=0, keepdims=True) * inv_b
            ex2 = jnp.sum(h * h, axis=0, keepdims=True) * inv_b
            var = jnp.maximum(ex2 - mean * mean, 0.0)

            # Fused normalize + affine + ReLU.  rsqrt -> EUP slot.
            scale = gamma * jax.lax.rsqrt(var + BN_EPS)
            shift = beta - mean * scale
            return jnp.maximum(h * scale + shift, 0.0).astype(jnp.bfloat16)

        h = layer(x_ref[...], w1_ref, offs[0], l1p)
        h = layer(h, w2_ref, offs[1], l2p)
        h = layer(h, w3_ref, offs[2], l3p)

        # Final linear layer: lane-dense (B, out_p) f32 slab (unmasked vst).
        b4 = aff_ref[0:1, offs[3]:offs[3] + out_p]
        o_ref[...] = (jnp.dot(h, w4_ref[...], preferred_element_type=jnp.float32)
                      + b4)

    return kernel


# -----------------------------------------------------------------------------
# One-time parameter preparation (casts / padding / packing done ONCE).
# -----------------------------------------------------------------------------
def prepare_params(params, input_dim, output_dim, l1=512, l2=256, l3=128):
    (w1, b1, g1, be1,
     w2, b2, g2, be2,
     w3, b3, g3, be3,
     w4, b4) = params
    del b1, b2, b3  # cancel exactly under training-mode BatchNorm

    in_p = _round_up(input_dim)
    l1p, l2p, l3p = _round_up(l1), _round_up(l2), _round_up(l3)
    out_p = _round_up(output_dim)

    def pad_w(w, rp, cp):
        r, c = w.shape
        return jnp.pad(w.astype(jnp.bfloat16), ((0, rp - r), (0, cp - c)))

    w1_bf = pad_w(w1, in_p, l1p)
    w2_bf = pad_w(w2, l1p, l2p)
    w3_bf = pad_w(w3, l2p, l3p)
    w4_bf = pad_w(w4, l3p, out_p)

    def pad_v(v, n):
        return jnp.pad(v.astype(jnp.float32), ((0, 0), (0, n - v.shape[1])))

    # Packed affine operand (2, l1p+l2p+l3p+out_p), 128-aligned per layer:
    #   row 0 = [gamma1 | gamma2 | gamma3 | b4(padded)]
    #   row 1 = [beta1  | beta2  | beta3  | 0         ]
    # Padded gamma entries are 0, so padded features are forced to 0 output.
    row0 = jnp.concatenate(
        [pad_v(g1, l1p), pad_v(g2, l2p), pad_v(g3, l3p), pad_v(b4, out_p)], axis=1)
    row1 = jnp.concatenate(
        [pad_v(be1, l1p), pad_v(be2, l2p), pad_v(be3, l3p),
         jnp.zeros((1, out_p), jnp.float32)], axis=1)
    aff = jnp.concatenate([row0, row1], axis=0)

    prepped = (w1_bf, w2_bf, w3_bf, w4_bf, aff)
    dims = dict(input_dim=input_dim, output_dim=output_dim,
                in_pad=in_p, pads=(l1p, l2p, l3p, out_p))
    return prepped, dims


# -----------------------------------------------------------------------------
# Forward wrapper
# -----------------------------------------------------------------------------
def net_forward(x, prepped, dims):
    """Single-invocation whole-batch forward pass (training-mode BN)."""
    w1_bf, w2_bf, w3_bf, w4_bf, aff = prepped
    B, in_dim = x.shape
    in_p = dims["in_pad"]
    l1p, l2p, l3p, out_p = dims["pads"]

    # Per-call input prep only: bf16 cast + lane pad of the tiny x slab.
    x_bf = jnp.pad(x.astype(jnp.bfloat16), ((0, 0), (0, in_p - in_dim)))

    inputs = (x_bf, w1_bf, w2_bf, w3_bf, w4_bf, aff)
    vmem = pl.BlockSpec(memory_space=pltpu.MemorySpace.VMEM)

    flops = (2 * B * (in_p * l1p + l1p * l2p + l2p * l3p + l3p * out_p)
             + 10 * B * (l1p + l2p + l3p))            # BN + ReLU elementwise
    op_bytes = (sum(int(a.size) * a.dtype.itemsize for a in inputs)
                + B * out_p * 4)
    cost = pl.CostEstimate(flops=flops,
                           transcendentals=l1p + l2p + l3p,  # rsqrt per feature
                           bytes_accessed=op_bytes)

    # Honest VMEM budget: ~4x the operand footprint, never above 32 MiB
    # (v7x has only 64 MiB physical per TensorCore).
    vmem_limit = int(min(32 * 1024 * 1024, max(4 * 1024 * 1024, 4 * op_bytes)))

    kernel = _make_net_kernel((l1p, l2p, l3p, out_p))

    out_full = pl.pallas_call(
        kernel,
        out_shape=jax.ShapeDtypeStruct((B, out_p), jnp.float32),
        in_specs=[vmem] * len(inputs),
        out_specs=vmem,
        cost_estimate=cost,
        compiler_params=pltpu.CompilerParams(vmem_limit_bytes=vmem_limit),
    )(*inputs)

    return out_full[:, :dims["output_dim"]]


# -----------------------------------------------------------------------------
# Parameter init + references
# -----------------------------------------------------------------------------
def init_params(key, input_dim, output_dim, l1=512, l2=256, l3=128):
    """PyTorch-style uniform(-1/sqrt(fan_in), 1/sqrt(fan_in)) init."""
    def linear(k, fan_in, fan_out):
        kw, kb = jax.random.split(k)
        bound = 1.0 / jnp.sqrt(fan_in)
        w = jax.random.uniform(kw, (fan_in, fan_out), jnp.float32, -bound, bound)
        b = jax.random.uniform(kb, (1, fan_out), jnp.float32, -bound, bound)
        return w, b

    k1, k2, k3, k4 = jax.random.split(key, 4)
    w1, b1 = linear(k1, input_dim, l1)
    w2, b2 = linear(k2, l1, l2)
    w3, b3 = linear(k3, l2, l3)
    w4, b4 = linear(k4, l3, output_dim)

    # BatchNorm1d affine params: weight=1, bias=0 (PyTorch default).
    g1, be1 = jnp.ones((1, l1), jnp.float32), jnp.zeros((1, l1), jnp.float32)
    g2, be2 = jnp.ones((1, l2), jnp.float32), jnp.zeros((1, l2), jnp.float32)
    g3, be3 = jnp.ones((1, l3), jnp.float32), jnp.zeros((1, l3), jnp.float32)

    return (w1, b1, g1, be1,
            w2, b2, g2, be2,
            w3, b3, g3, be3,
            w4, b4)


def net_reference_matched(x, params):
    """Pure-JAX reference with the kernel's exact math (bf16 matmuls, no fc1-3
    bias, single-pass clamped variance)."""
    (w1, _b1, g1, be1,
     w2, _b2, g2, be2,
     w3, _b3, g3, be3,
     w4, b4) = params
    inv_b = 1.0 / x.shape[0]

    def layer(h_bf, w, g, be):
        h = jnp.dot(h_bf, w.astype(jnp.bfloat16),
                    preferred_element_type=jnp.float32)
        mean = jnp.sum(h, axis=0, keepdims=True) * inv_b
        ex2 = jnp.sum(h * h, axis=0, keepdims=True) * inv_b
        var = jnp.maximum(ex2 - mean * mean, 0.0)
        scale = g * jax.lax.rsqrt(var + BN_EPS)
        shift = be - mean * scale
        return jnp.maximum(h * scale + shift, 0.0).astype(jnp.bfloat16)

    h = layer(x.astype(jnp.bfloat16), w1, g1, be1)
    h = layer(h, w2, g2, be2)
    h = layer(h, w3, g3, be3)
    return jnp.dot(h, w4.astype(jnp.bfloat16),
                   preferred_element_type=jnp.float32) + b4


def net_reference_f32(x, params):
    """Literal PyTorch math in f32 (training-mode BatchNorm, biases included —
    fc1-3 biases cancel under BN, proving the kernel's bias-drop is valid)."""
    (w1, b1, g1, be1,
     w2, b2, g2, be2,
     w3, b3, g3, be3,
     w4, b4) = params

    def bn_relu(h, g, be):
        m = jnp.mean(h, axis=0, keepdims=True)
        v = jnp.mean((h - m) ** 2, axis=0, keepdims=True)
        return jnp.maximum((h - m) * jax.lax.rsqrt(v + BN_EPS) * g + be, 0.0)

    h = bn_relu(x @ w1 + b1, g1, be1)
    h = bn_relu(h @ w2 + b2, g2, be2)
    h = bn_relu(h @ w3 + b3, g3, be3)
    return h @ w4 + b4


if __name__ == "__main__":
    # Small shapes consistent with the module (BatchNorm needs batch >= 2).
    B, INPUT_DIM, OUTPUT_DIM = 16, 32, 4

    key = jax.random.PRNGKey(0)
    kx, kp = jax.random.split(key)
    x = jax.random.normal(kx, (B, INPUT_DIM), jnp.float32)
    params = init_params(kp, INPUT_DIM, OUTPUT_DIM)

    # One-time parameter prep (casts / padding / packing).
    prepped, dims = prepare_params(params, INPUT_DIM, OUTPUT_DIM)

    out = jax.block_until_ready(net_forward(x, prepped, dims))
    assert out.shape == (B, OUTPUT_DIM)

    # 1) Tight check against a reference with identical mixed-precision math.
    ref_m = net_reference_matched(x, params)
    assert jnp.allclose(out, ref_m, atol=2e-3, rtol=2e-3), \
        float(jnp.max(jnp.abs(out - ref_m)))

    # 2) Loose check against full-f32 PyTorch-equivalent math (bf16 matmul
    #    inputs cost ~1% relative accuracy).
    ref_f = net_reference_f32(x, params)
    assert jnp.allclose(out, ref_f, atol=1e-1, rtol=1e-1), \
        float(jnp.max(jnp.abs(out - ref_f)))

    print("KERNEL_OK")
</pallas_src>

<mosaic_0001>
module attributes {stable_mosaic.version = 11 : i64} {
  func.func @kernel(%arg0: memref<16x128xbf16, #tpu.memory_space<vmem>>, %arg1: memref<128x512xbf16, #tpu.memory_space<vmem>>, %arg2: memref<512x256xbf16, #tpu.memory_space<vmem>>, %arg3: memref<256x128xbf16, #tpu.memory_space<vmem>>, %arg4: memref<128x128xbf16, #tpu.memory_space<vmem>>, %arg5: memref<2x1024xf32, #tpu.memory_space<vmem>>, %arg6: memref<16x128xf32, #tpu.memory_space<vmem>>) attributes {dimension_semantics = [], scalar_prefetch = 0 : i64, scratch_operands = 0 : i64, tpu.core_type = #tpu.core_type<tc>} {
    %c0 = arith.constant 0 : index
    %c0_0 = arith.constant 0 : index
    %0 = vector.load %arg0[%c0, %c0_0] : memref<16x128xbf16, #tpu.memory_space<vmem>>, vector<16x128xbf16>
    %c0_1 = arith.constant 0 : index
    %c0_2 = arith.constant 0 : index
    %1 = vector.load %arg5[%c0_1, %c0_2] : memref<2x1024xf32, #tpu.memory_space<vmem>>, vector<1x512xf32>
    %c1 = arith.constant 1 : index
    %c0_3 = arith.constant 0 : index
    %2 = vector.load %arg5[%c1, %c0_3] : memref<2x1024xf32, #tpu.memory_space<vmem>>, vector<1x512xf32>
    %c0_4 = arith.constant 0 : index
    %c0_5 = arith.constant 0 : index
    %3 = vector.load %arg1[%c0_4, %c0_5] : memref<128x512xbf16, #tpu.memory_space<vmem>>, vector<128x512xbf16>
    %cst = arith.constant dense<0.000000e+00> : vector<16x512xf32>
    %4 = tpu.matmul %0, %3, %cst {dimension_numbers = #tpu.dot_dimension_numbers<[1], [0], [0], [1], [0, 0, 1, 1], [], []>} : vector<16x128xbf16>, vector<128x512xbf16>, vector<16x512xf32> -> vector<16x512xf32>
    %cst_6 = arith.constant dense<0.000000e+00> : vector<512xf32>
    %5 = vector.multi_reduction <add>, %4, %cst_6 [0] : vector<16x512xf32> to vector<512xf32>
    %6 = vector.shape_cast %5 : vector<512xf32> to vector<1x512xf32>
    %cst_7 = arith.constant 6.250000e-02 : f32
    %7 = vector.broadcast %cst_7 : f32 to vector<1x512xf32>
    %8 = arith.mulf %6, %7 : vector<1x512xf32>
    %9 = arith.mulf %4, %4 : vector<16x512xf32>
    %cst_8 = arith.constant dense<0.000000e+00> : vector<512xf32>
    %10 = vector.multi_reduction <add>, %9, %cst_8 [0] : vector<16x512xf32> to vector<512xf32>
    %11 = vector.shape_cast %10 : vector<512xf32> to vector<1x512xf32>
    %cst_9 = arith.constant 6.250000e-02 : f32
    %12 = vector.broadcast %cst_9 : f32 to vector<1x512xf32>
    %13 = arith.mulf %11, %12 : vector<1x512xf32>
    %14 = arith.mulf %8, %8 : vector<1x512xf32>
    %15 = arith.subf %13, %14 : vector<1x512xf32>
    %cst_10 = arith.constant 0.000000e+00 : f32
    %16 = vector.broadcast %cst_10 : f32 to vector<1x512xf32>
    %17 = arith.maximumf %15, %16 : vector<1x512xf32>
    %cst_11 = arith.constant 9.99999974E-6 : f32
    %18 = vector.broadcast %cst_11 : f32 to vector<1x512xf32>
    %19 = arith.addf %17, %18 : vector<1x512xf32>
    %20 = math.rsqrt %19 : vector<1x512xf32>
    %21 = arith.mulf %1, %20 : vector<1x512xf32>
    %22 = arith.mulf %8, %21 : vector<1x512xf32>
    %23 = arith.subf %2, %22 : vector<1x512xf32>
    %24 = vector.broadcast %21 : vector<1x512xf32> to vector<16x512xf32>
    %25 = arith.mulf %4, %24 : vector<16x512xf32>
    %26 = vector.broadcast %23 : vector<1x512xf32> to vector<16x512xf32>
    %27 = arith.addf %25, %26 : vector<16x512xf32>
    %cst_12 = arith.constant 0.000000e+00 : f32
    %28 = vector.broadcast %cst_12 : f32 to vector<16x512xf32>
    %29 = arith.maximumf %27, %28 : vector<16x512xf32>
    %30 = arith.truncf %29 : vector<16x512xf32> to vector<16x512xbf16>
    %c0_13 = arith.constant 0 : index
    %c512 = arith.constant 512 : index
    %31 = vector.load %arg5[%c0_13, %c512] : memref<2x1024xf32, #tpu.memory_space<vmem>>, vector<1x256xf32>
    %c1_14 = arith.constant 1 : index
    %c512_15 = arith.constant 512 : index
    %32 = vector.load %arg5[%c1_14, %c512_15] : memref<2x1024xf32, #tpu.memory_space<vmem>>, vector<1x256xf32>
    %c0_16 = arith.constant 0 : index
    %c0_17 = arith.constant 0 : index
    %33 = vector.load %arg2[%c0_16, %c0_17] : memref<512x256xbf16, #tpu.memory_space<vmem>>, vector<512x256xbf16>
    %cst_18 = arith.constant dense<0.000000e+00> : vector<16x256xf32>
    %34 = tpu.matmul %30, %33, %cst_18 {dimension_numbers = #tpu.dot_dimension_numbers<[1], [0], [0], [1], [0, 0, 1, 1], [], []>} : vector<16x512xbf16>, vector<512x256xbf16>, vector<16x256xf32> -> vector<16x256xf32>
    %cst_19 = arith.constant dense<0.000000e+00> : vector<256xf32>
    %35 = vector.multi_reduction <add>, %34, %cst_19 [0] : vector<16x256xf32> to vector<256xf32>
    %36 = vector.shape_cast %35 : vector<256xf32> to vector<1x256xf32>
    %cst_20 = arith.constant 6.250000e-02 : f32
    %37 = vector.broadcast %cst_20 : f32 to vector<1x256xf32>
    %38 = arith.mulf %36, %37 : vector<1x256xf32>
    %39 = arith.mulf %34, %34 : vector<16x256xf32>
    %cst_21 = arith.constant dense<0.000000e+00> : vector<256xf32>
    %40 = vector.multi_reduction <add>, %39, %cst_21 [0] : vector<16x256xf32> to vector<256xf32>
    %41 = vector.shape_cast %40 : vector<256xf32> to vector<1x256xf32>
    %cst_22 = arith.constant 6.250000e-02 : f32
    %42 = vector.broadcast %cst_22 : f32 to vector<1x256xf32>
    %43 = arith.mulf %41, %42 : vector<1x256xf32>
    %44 = arith.mulf %38, %38 : vector<1x256xf32>
    %45 = arith.subf %43, %44 : vector<1x256xf32>
    %cst_23 = arith.constant 0.000000e+00 : f32
    %46 = vector.broadcast %cst_23 : f32 to vector<1x256xf32>
    %47 = arith.maximumf %45, %46 : vector<1x256xf32>
    %cst_24 = arith.constant 9.99999974E-6 : f32
    %48 = vector.broadcast %cst_24 : f32 to vector<1x256xf32>
    %49 = arith.addf %47, %48 : vector<1x256xf32>
    %50 = math.rsqrt %49 : vector<1x256xf32>
    %51 = arith.mulf %31, %50 : vector<1x256xf32>
    %52 = arith.mulf %38, %51 : vector<1x256xf32>
    %53 = arith.subf %32, %52 : vector<1x256xf32>
    %54 = vector.broadcast %51 : vector<1x256xf32> to vector<16x256xf32>
    %55 = arith.mulf %34, %54 : vector<16x256xf32>
    %56 = vector.broadcast %53 : vector<1x256xf32> to vector<16x256xf32>
    %57 = arith.addf %55, %56 : vector<16x256xf32>
    %cst_25 = arith.constant 0.000000e+00 : f32
    %58 = vector.broadcast %cst_25 : f32 to vector<16x256xf32>
    %59 = arith.maximumf %57, %58 : vector<16x256xf32>
    %60 = arith.truncf %59 : vector<16x256xf32> to vector<16x256xbf16>
    %c0_26 = arith.constant 0 : index
    %c768 = arith.constant 768 : index
    %61 = vector.load %arg5[%c0_26, %c768] : memref<2x1024xf32, #tpu.memory_space<vmem>>, vector<1x128xf32>
    %c1_27 = arith.constant 1 : index
    %c768_28 = arith.constant 768 : index
    %62 = vector.load %arg5[%c1_27, %c768_28] : memref<2x1024xf32, #tpu.memory_space<vmem>>, vector<1x128xf32>
    %c0_29 = arith.constant 0 : index
    %c0_30 = arith.constant 0 : index
    %63 = vector.load %arg3[%c0_29, %c0_30] : memref<256x128xbf16, #tpu.memory_space<vmem>>, vector<256x128xbf16>
    %cst_31 = arith.constant dense<0.000000e+00> : vector<16x128xf32>
    %64 = tpu.matmul %60, %63, %cst_31 {dimension_numbers = #tpu.dot_dimension_numbers<[1], [0], [0], [1], [0, 0, 1, 1], [], []>} : vector<16x256xbf16>, vector<256x128xbf16>, vector<16x128xf32> -> vector<16x128xf32>
    %cst_32 = arith.constant dense<0.000000e+00> : vector<128xf32>
    %65 = vector.multi_reduction <add>, %64, %cst_32 [0] : vector<16x128xf32> to vector<128xf32>
    %66 = vector.shape_cast %65 : vector<128xf32> to vector<1x128xf32>
    %cst_33 = arith.constant 6.250000e-02 : f32
    %67 = vector.broadcast %cst_33 : f32 to vector<1x128xf32>
    %68 = arith.mulf %66, %67 : vector<1x128xf32>
    %69 = arith.mulf %64, %64 : vector<16x128xf32>
    %cst_34 = arith.constant dense<0.000000e+00> : vector<128xf32>
    %70 = vector.multi_reduction <add>, %69, %cst_34 [0] : vector<16x128xf32> to vector<128xf32>
    %71 = vector.shape_cast %70 : vector<128xf32> to vector<1x128xf32>
    %cst_35 = arith.constant 6.250000e-02 : f32
    %72 = vector.broadcast %cst_35 : f32 to vector<1x128xf32>
    %73 = arith.mulf %71, %72 : vector<1x128xf32>
    %74 = arith.mulf %68, %68 : vector<1x128xf32>
    %75 = arith.subf %73, %74 : vector<1x128xf32>
    %cst_36 = arith.constant 0.000000e+00 : f32
    %76 = vector.broadcast %cst_36 : f32 to vector<1x128xf32>
    %77 = arith.maximumf %75, %76 : vector<1x128xf32>
    %cst_37 = arith.constant 9.99999974E-6 : f32
    %78 = vector.broadcast %cst_37 : f32 to vector<1x128xf32>
    %79 = arith.addf %77, %78 : vector<1x128xf32>
    %80 = math.rsqrt %79 : vector<1x128xf32>
    %81 = arith.mulf %61, %80 : vector<1x128xf32>
    %82 = arith.mulf %68, %81 : vector<1x128xf32>
    %83 = arith.subf %62, %82 : vector<1x128xf32>
    %84 = vector.broadcast %81 : vector<1x128xf32> to vector<16x128xf32>
    %85 = arith.mulf %64, %84 : vector<16x128xf32>
    %86 = vector.broadcast %83 : vector<1x128xf32> to vector<16x128xf32>
    %87 = arith.addf %85, %86 : vector<16x128xf32>
    %cst_38 = arith.constant 0.000000e+00 : f32
    %88 = vector.broadcast %cst_38 : f32 to vector<16x128xf32>
    %89 = arith.maximumf %87, %88 : vector<16x128xf32>
    %90 = arith.truncf %89 : vector<16x128xf32> to vector<16x128xbf16>
    %c0_39 = arith.constant 0 : index
    %c896 = arith.constant 896 : index
    %91 = vector.load %arg5[%c0_39, %c896] : memref<2x1024xf32, #tpu.memory_space<vmem>>, vector<1x128xf32>
    %c0_40 = arith.constant 0 : index
    %c0_41 = arith.constant 0 : index
    %92 = vector.load %arg4[%c0_40, %c0_41] : memref<128x128xbf16, #tpu.memory_space<vmem>>, vector<128x128xbf16>
    %cst_42 = arith.constant dense<0.000000e+00> : vector<16x128xf32>
    %93 = tpu.matmul %90, %92, %cst_42 {dimension_numbers = #tpu.dot_dimension_numbers<[1], [0], [0], [1], [0, 0, 1, 1], [], []>} : vector<16x128xbf16>, vector<128x128xbf16>, vector<16x128xf32> -> vector<16x128xf32>
    %94 = vector.broadcast %91 : vector<1x128xf32> to vector<16x128xf32>
    %95 = arith.addf %93, %94 : vector<16x128xf32>
    %c0_43 = arith.constant 0 : index
    %c0_44 = arith.constant 0 : index
    %96 = vector.load %arg6[%c0_43, %c0_44] : memref<16x128xf32, #tpu.memory_space<vmem>>, vector<16x128xf32>
    tpu.vector_store %arg6[%c0_43, %c0_44], %95 {strides = array<i32>} : memref<16x128xf32, #tpu.memory_space<vmem>>, vector<16x128xf32>,
    return
  }
}

</mosaic_0001>

<llo_original>
// kernel: tpu_custom_call.1
$region0: #{tpu_custom_call.1}
  #allocation0 [shape = 'u32[]', space=smem, size = 0x4, offset = 0x4, fixed_abs, tag = 'smem constant byte address 0x4 - core index']
  #allocation1 [shape = 'u32[72,128]{1,0:T(1,128)}', space=vmem, size = 0x9000, scoped, tag = 'internal scratch']
  %s0 = inlined_call_operand.hbm [shape: bf16[16,128], index: 0, kind: input, shape index: {}]
  %s1 = inlined_call_operand.hbm [shape: bf16[128,512], index: 1, kind: input, shape index: {}]
  %s2 = inlined_call_operand.hbm [shape: bf16[512,256], index: 2, kind: input, shape index: {}]
  %s3 = inlined_call_operand.hbm [shape: bf16[256,128], index: 3, kind: input, shape index: {}]
  %s4 = inlined_call_operand.hbm [shape: bf16[128,128], index: 4, kind: input, shape index: {}]
  %s5 = inlined_call_operand.hbm [shape: f32[2,1024], index: 5, kind: input, shape index: {}]
  %s6 = inlined_call_operand.hbm [shape: f32[16,128], index: 6, kind: output, shape index: {}]
  %s7 = sld [smem:[#allocation0]]
  $region58: #{tpu_custom_call.1} parent=0
    _
  %s9 = ssub.s32 1, %s7
  %s10 = scalar_select 0, %s9, %s7
  $region1: #{tpu_custom_call.1} parent=0
    #allocation2 [shape = 'u8[4096]{0}', space=vmem, size = 0x1000, scoped, tag = 'input window, operand 0, single buffered']
    #allocation3 [shape = 's32[1]{0}', space=sflag, size = 0x4, scoped, tag = 'scoped memory for tpu_custom_call.1']
    #allocation4 [shape = 's32[1]{0}', space=sflag, size = 0x4, scoped, tag = 'scoped memory for tpu_custom_call.1']
    #allocation5 [shape = 'u8[131072]{0}', space=vmem, size = 0x20000, scoped, tag = 'input window, operand 1, single buffered']
    #allocation6 [shape = 's32[1]{0}', space=sflag, size = 0x4, scoped, tag = 'scoped memory for tpu_custom_call.1']
    #allocation7 [shape = 'u8[262144]{0}', space=vmem, size = 0x40000, scoped, tag = 'input window, operand 2, single buffered']
    #allocation8 [shape = 'u8[65536]{0}', space=vmem, size = 0x10000, scoped, tag = 'input window, operand 3, single buffered']
    #allocation9 [shape = 's32[1]{0}', space=sflag, size = 0x4, scoped, tag = 'scoped memory for tpu_custom_call.1']
    #allocation10 [shape = 'u8[32768]{0}', space=vmem, size = 0x8000, scoped, tag = 'input window, operand 4, single buffered']
    #allocation11 [shape = 'u8[8192]{0}', space=vmem, size = 0x2000, scoped, tag = 'input window, operand 5, single buffered']
    #allocation12 [shape = 's32[1]{0}', space=sflag, size = 0x4, scoped, tag = 'scoped memory for tpu_custom_call.1']
    #allocation13 [shape = 'u8[8192]{0}', space=vmem, size = 0x2000, scoped, tag = 'output window, operand 0, single buffered']
    %11 = vsyncpa [#allocation3], 0
    %12 = vsyncpa [#allocation6], 0
    %13 = vsyncpa [#allocation9], 0
    %14 = vsyncpa [#allocation12], 0
    %15 = vsyncpa [#allocation4], 0
    // Predicated region
    $region2: #{tpu_custom_call.1} parent=1 // pred_check
      _
    $region3: #{tpu_custom_call.1} parent=1 // pred_check_branch
      %17 = sbr.rel (0) target = $region5
    $region4: #{tpu_custom_call.1} parent=1 // pred_region
      %19 = vsyncadd [#allocation3], 0
      %s20 = sshll.u32 %s0, 4
      %s21 = int_to_ptr.hbm [resolvable:$true] %s20
      %s22 = sshll.u32 [#allocation2], 4
      %s23 = int_to_ptr.vmem [resolvable:$true] %s22
      %28 = dma.hbm_to_vmem [thread:$0]  %s21, 128, %s23, [#allocation3], 64, 64, 4
    $region5: #{tpu_custom_call.1} parent=1 // pred_fallthru
      _
    // Predicated region
    $region6: #{tpu_custom_call.1} parent=1 // pred_check
      _
    $region7: #{tpu_custom_call.1} parent=1 // pred_check_branch
      %30 = sbr.rel (0) target = $region9
    $region8: #{tpu_custom_call.1} parent=1 // pred_region
      %32 = vsyncadd [#allocation6], 0
      %s33 = sshll.u32 %s1, 4
      %s34 = int_to_ptr.hbm [resolvable:$true] %s33
      %s35 = sshll.u32 [#allocation5], 4
      %s36 = int_to_ptr.vmem [resolvable:$true] %s35
      %41 = dma.hbm_to_vmem [thread:$0]  %s34, 4096, %s36, [#allocation6], 256, 256, 16
    $region9: #{tpu_custom_call.1} parent=1 // pred_fallthru
      _
    // Predicated region
    $region10: #{tpu_custom_call.1} parent=1 // pred_check
      _
    $region11: #{tpu_custom_call.1} parent=1 // pred_check_branch
      %43 = sbr.rel (0) target = $region13
    $region12: #{tpu_custom_call.1} parent=1 // pred_region
      %45 = vsyncadd [#allocation6], 0
      %s46 = sshll.u32 %s2, 4
      %s47 = int_to_ptr.hbm [resolvable:$true] %s46
      %s48 = sshll.u32 [#allocation7], 4
      %s49 = int_to_ptr.vmem [resolvable:$true] %s48
      %54 = dma.hbm_to_vmem [thread:$0]  %s47, 8192, %s49, [#allocation6], 128, 128, 8
    $region13: #{tpu_custom_call.1} parent=1 // pred_fallthru
      _
    // Predicated region
    $region14: #{tpu_custom_call.1} parent=1 // pred_check
      _
    $region15: #{tpu_custom_call.1} parent=1 // pred_check_branch
      %56 = sbr.rel (0) target = $region17
    $region16: #{tpu_custom_call.1} parent=1 // pred_region
      %58 = vsyncadd [#allocation9], 0
      %s59 = sshll.u32 %s3, 4
      %s60 = int_to_ptr.hbm [resolvable:$true] %s59
      %s61 = sshll.u32 [#allocation8], 4
      %s62 = int_to_ptr.vmem [resolvable:$true] %s61
      %67 = dma.hbm_to_vmem [thread:$0]  %s60, 2048, %s62, [#allocation9], 64, 64, 4
    $region17: #{tpu_custom_call.1} parent=1 // pred_fallthru
      _
    // Predicated region
    $region18: #{tpu_custom_call.1} parent=1 // pred_check
      _
    $region19: #{tpu_custom_call.1} parent=1 // pred_check_branch
      %69 = sbr.rel (0) target = $region21
    $region20: #{tpu_custom_call.1} parent=1 // pred_region
      %71 = vsyncadd [#allocation9], 0
      %s72 = sshll.u32 %s4, 4
      %s73 = int_to_ptr.hbm [resolvable:$true] %s72
      %s74 = sshll.u32 [#allocation10], 4
      %s75 = int_to_ptr.vmem [resolvable:$true] %s74
      %80 = dma.hbm_to_vmem [thread:$0]  %s73, 1024, %s75, [#allocation9], 64, 64, 4
    $region21: #{tpu_custom_call.1} parent=1 // pred_fallthru
      _
    // Predicated region
    $region22: #{tpu_custom_call.1} parent=1 // pred_check
      _
    $region23: #{tpu_custom_call.1} parent=1 // pred_check_branch
      %82 = sbr.rel (0) target = $region25
    $region24: #{tpu_custom_call.1} parent=1 // pred_region
      %84 = vsyncadd [#allocation12], 0
      %s86 = sshll.u32 %s5, 4
      %s87 = int_to_ptr.hbm [resolvable:$true] %s86
      %s88 = sshll.u32 [#allocation11], 4
      %s89 = int_to_ptr.vmem [resolvable:$true] %s88
      %91 = dma.hbm_to_vmem [thread:$0]  %s87, 256, %s89, [#allocation12]
    $region25: #{tpu_custom_call.1} parent=1 // pred_fallthru
      _
    // Predicated region
    $region26: #{tpu_custom_call.1} parent=1 // pred_check
      _
    $region27: #{tpu_custom_call.1} parent=1 // pred_check_branch
      %93 = sbr.rel (0) target = $region29
    $region28: #{tpu_custom_call.1} parent=1 // pred_region
      %95 = dma.done [#allocation3], 128
    $region29: #{tpu_custom_call.1} parent=1 // pred_fallthru
      _
    // Predicated region
    $region30: #{tpu_custom_call.1} parent=1 // pred_check
      _
    $region31: #{tpu_custom_call.1} parent=1 // pred_check_branch
      %97 = sbr.rel (0) target = $region33
    $region32: #{tpu_custom_call.1} parent=1 // pred_region
      %99 = dma.done [#allocation6], 4096
    $region33: #{tpu_custom_call.1} parent=1 // pred_fallthru
      _
    // Predicated region
    $region34: #{tpu_custom_call.1} parent=1 // pred_check
      _
    $region35: #{tpu_custom_call.1} parent=1 // pred_check_branch
      %101 = sbr.rel (0) target = $region37
    $region36: #{tpu_custom_call.1} parent=1 // pred_region
      %103 = dma.done [#allocation6], 8192
    $region37: #{tpu_custom_call.1} parent=1 // pred_fallthru
      _
    // Predicated region
    $region38: #{tpu_custom_call.1} parent=1 // pred_check
      _
    $region39: #{tpu_custom_call.1} parent=1 // pred_check_branch
      %105 = sbr.rel (0) target = $region41
    $region40: #{tpu_custom_call.1} parent=1 // pred_region
      %107 = dma.done [#allocation9], 2048
    $region41: #{tpu_custom_call.1} parent=1 // pred_fallthru
      _
    // Predicated region
    $region42: #{tpu_custom_call.1} parent=1 // pred_check
      _
    $region43: #{tpu_custom_call.1} parent=1 // pred_check_branch
      %109 = sbr.rel (0) target = $region45
    $region44: #{tpu_custom_call.1} parent=1 // pred_region
      %111 = dma.done [#allocation9], 1024
    $region45: #{tpu_custom_call.1} parent=1 // pred_fallthru
      _
    // Predicated region
    $region46: #{tpu_custom_call.1} parent=1 // pred_check
      _
    $region47: #{tpu_custom_call.1} parent=1 // pred_check_branch
      %113 = sbr.rel (0) target = $region49
    $region48: #{tpu_custom_call.1} parent=1 // pred_region
      %115 = dma.done [#allocation12], 256
    $region49: #{tpu_custom_call.1} parent=1 // pred_fallthru
      _
    %v116 = vld [vmem:[#allocation2] sm:$0xf]
    %v117 = vld [vmem:[#allocation2 + $0x4] sm:$0xf]
    %v118 = vld [vmem:[#allocation11] ss:$2 sm:$0xf]
    %s119 = scalar_lea.vmem [#allocation11], 1
    %v120 = vld [vmem:[%s119] ss:$2 sm:$0xf]
    %v121 = vld [vmem:[#allocation5] sm:$0xff]
    %v122 = vld [vmem:[#allocation5 + $0x8] sm:$0xff]
    %v123 = vld [vmem:[#allocation5 + $0x10] sm:$0xff]
    %v124 = vld [vmem:[#allocation5 + $0x18] sm:$0xff]
    %v125 = vld [vmem:[#allocation5 + $0x20] sm:$0xff]
    %v126 = vld [vmem:[#allocation5 + $0x28] sm:$0xff]
    %v127 = vld [vmem:[#allocation5 + $0x30] sm:$0xff]
    %v128 = vld [vmem:[#allocation5 + $0x38] sm:$0xff]
    %v129 = vld [vmem:[#allocation5 + $0x40] sm:$0xff]
    %v130 = vld [vmem:[#allocation5 + $0x48] sm:$0xff]
    %v131 = vld [vmem:[#allocation5 + $0x50] sm:$0xff]
    %v132 = vld [vmem:[#allocation5 + $0x58] sm:$0xff]
    %v133 = vld [vmem:[#allocation5 + $0x60] sm:$0xff]
    %v134 = vld [vmem:[#allocation5 + $0x68] sm:$0xff]
    %v135 = vld [vmem:[#allocation5 + $0x70] sm:$0xff]
    %v136 = vld [vmem:[#allocation5 + $0x78] sm:$0xff]
    %v137 = vld [vmem:[#allocation5 + $0x80] sm:$0xff]
    %v138 = vld [vmem:[#allocation5 + $0x88] sm:$0xff]
    %v139 = vld [vmem:[#allocation5 + $0x90] sm:$0xff]
    %v140 = vld [vmem:[#allocation5 + $0x98] sm:$0xff]
    %v141 = vld [vmem:[#allocation5 + $0xa0] sm:$0xff]
    %v142 = vld [vmem:[#allocation5 + $0xa8] sm:$0xff]
    %v143 = vld [vmem:[#allocation5 + $0xb0] sm:$0xff]
    %v144 = vld [vmem:[#allocation5 + $0xb8] sm:$0xff]
    %v145 = vld [vmem:[#allocation5 + $0xc0] sm:$0xff]
    %v146 = vld [vmem:[#allocation5 + $0xc8] sm:$0xff]
    %v147 = vld [vmem:[#allocation5 + $0xd0] sm:$0xff]
    %v148 = vld [vmem:[#allocation5 + $0xd8] sm:$0xff]
    %v149 = vld [vmem:[#allocation5 + $0xe0] sm:$0xff]
    %v150 = vld [vmem:[#allocation5 + $0xe8] sm:$0xff]
    %v151 = vld [vmem:[#allocation5 + $0xf0] sm:$0xff]
    %v152 = vld [vmem:[#allocation5 + $0xf8] sm:$0xff]
    %v155 = vunpack.c.l.b16 %v116
    %v156 = vunpack.c.l.b16 %v117
    %v157 = vpack.c.b16 %v156, %v155
    %v191 = vunpack.c.l.b16 %v121
    %v192 = vunpack.c.h.b16 %v121
    %v193 = vunpack.c.l.b16 %v122
    %v194 = vunpack.c.h.b16 %v122
    %v195 = vunpack.c.l.b16 %v123
    %v196 = vunpack.c.h.b16 %v123
    %v197 = vunpack.c.l.b16 %v124
    %v198 = vunpack.c.h.b16 %v124
    %v199 = vunpack.c.l.b16 %v125
    %v200 = vunpack.c.h.b16 %v125
    %v201 = vunpack.c.l.b16 %v126
    %v202 = vunpack.c.h.b16 %v126
    %v203 = vunpack.c.l.b16 %v127
    %v204 = vunpack.c.h.b16 %v127
    %v205 = vunpack.c.l.b16 %v128
    %v206 = vunpack.c.h.b16 %v128
    %v207 = vunpack.c.l.b16 %v129
    %v208 = vunpack.c.h.b16 %v129
    %v209 = vunpack.c.l.b16 %v130
    %v210 = vunpack.c.h.b16 %v130
    %v211 = vunpack.c.l.b16 %v131
    %v212 = vunpack.c.h.b16 %v131
    %v213 = vunpack.c.l.b16 %v132
    %v214 = vunpack.c.h.b16 %v132
    %v215 = vunpack.c.l.b16 %v133
    %v216 = vunpack.c.h.b16 %v133
    %v217 = vunpack.c.l.b16 %v134
    %v218 = vunpack.c.h.b16 %v134
    %v219 = vunpack.c.l.b16 %v135
    %v220 = vunpack.c.h.b16 %v135
    %v221 = vunpack.c.l.b16 %v136
    %v222 = vunpack.c.h.b16 %v136
    %v223 = vunpack.c.l.b16 %v137
    %v224 = vunpack.c.h.b16 %v137
    %v225 = vunpack.c.l.b16 %v138
    %v226 = vunpack.c.h.b16 %v138
    %v227 = vunpack.c.l.b16 %v139
    %v228 = vunpack.c.h.b16 %v139
    %v229 = vunpack.c.l.b16 %v140
    %v230 = vunpack.c.h.b16 %v140
    %v231 = vunpack.c.l.b16 %v141
    %v232 = vunpack.c.h.b16 %v141
    %v233 = vunpack.c.l.b16 %v142
    %v234 = vunpack.c.h.b16 %v142
    %v235 = vunpack.c.l.b16 %v143
    %v236 = vunpack.c.h.b16 %v143
    %v237 = vunpack.c.l.b16 %v144
    %v238 = vunpack.c.h.b16 %v144
    %v239 = vunpack.c.l.b16 %v145
    %v240 = vunpack.c.h.b16 %v145
    %v241 = vunpack.c.l.b16 %v146
    %v242 = vunpack.c.h.b16 %v146
    %v243 = vunpack.c.l.b16 %v147
    %v244 = vunpack.c.h.b16 %v147
    %v245 = vunpack.c.l.b16 %v148
    %v246 = vunpack.c.h.b16 %v148
    %v247 = vunpack.c.l.b16 %v149
    %v248 = vunpack.c.h.b16 %v149
    %v249 = vunpack.c.l.b16 %v150
    %v250 = vunpack.c.h.b16 %v150
    %v251 = vunpack.c.l.b16 %v151
    %v252 = vunpack.c.h.b16 %v151
    %v253 = vunpack.c.l.b16 %v152
    %v254 = vunpack.c.h.b16 %v152
    %v255 = vpack.c.b16 %v195, %v191
    %v256 = vpack.c.b16 %v196, %v192
    %v257 = vpack.c.b16 %v197, %v193
    %v258 = vpack.c.b16 %v198, %v194
    %v259 = vpack.c.b16 %v203, %v199
    %v260 = vpack.c.b16 %v204, %v200
    %v261 = vpack.c.b16 %v205, %v201
    %v262 = vpack.c.b16 %v206, %v202
    %v263 = vpack.c.b16 %v211, %v207
    %v264 = vpack.c.b16 %v212, %v208
    %v265 = vpack.c.b16 %v213, %v209
    %v266 = vpack.c.b16 %v214, %v210
    %v267 = vpack.c.b16 %v219, %v215
    %v268 = vpack.c.b16 %v220, %v216
    %v269 = vpack.c.b16 %v221, %v217
    %v270 = vpack.c.b16 %v222, %v218
    %v271 = vpack.c.b16 %v227, %v223
    %v272 = vpack.c.b16 %v228, %v224
    %v273 = vpack.c.b16 %v229, %v225
    %v274 = vpack.c.b16 %v230, %v226
    %v275 = vpack.c.b16 %v235, %v231
    %v276 = vpack.c.b16 %v236, %v232
    %v277 = vpack.c.b16 %v237, %v233
    %v278 = vpack.c.b16 %v238, %v234
    %v279 = vpack.c.b16 %v243, %v239
    %v280 = vpack.c.b16 %v244, %v240
    %v281 = vpack.c.b16 %v245, %v241
    %v282 = vpack.c.b16 %v246, %v242
    %v283 = vpack.c.b16 %v251, %v247
    %v284 = vpack.c.b16 %v252, %v248
    %v285 = vpack.c.b16 %v253, %v249
    %v286 = vpack.c.b16 %v254, %v250
    %319 = vmatpush.bf16.msra.mxu0 %v283
    %320 = vmatpush.bf16.msra.mxu0 %v279
    %321 = vmatpush.bf16.msra.mxu0 %v275
    %322 = vmatpush.bf16.msra.mxu0 %v271
    %323 = vmatpush.bf16.msra.mxu0 %v267
    %324 = vmatpush.bf16.msra.mxu0 %v263
    %325 = vmatpush.bf16.msra.mxu0 %v259
    %326 = vmatpush.bf16.msra.mxu0 %v255
    %327 = vmatmul.bf16.gmra.mxu0 %v157
    %v328 = vpop.f32.mrf.mxu0
    %v329 = vadd.f32 0.0, %v328
    %v330 = vpop.f32.mrf.mxu0
    %v331 = vadd.f32 0.0, %v330
    %332 = vdwg.mxu0
    %333 = vmatpush.bf16.msra.mxu0 %v284
    %334 = vmatpush.bf16.msra.mxu0 %v280
    %335 = vmatpush.bf16.msra.mxu0 %v276
    %336 = vmatpush.bf16.msra.mxu0 %v272
    %337 = vmatpush.bf16.msra.mxu0 %v268
    %338 = vmatpush.bf16.msra.mxu0 %v264
    %339 = vmatpush.bf16.msra.mxu0 %v260
    %340 = vmatpush.bf16.msra.mxu0 %v256
    %341 = vmatmul.bf16.gmra.mxu0 %v157
    %v342 = vpop.f32.mrf.mxu0
    %v343 = vadd.f32 0.0, %v342
    %v344 = vpop.f32.mrf.mxu0
    %v345 = vadd.f32 0.0, %v344
    %346 = vdwg.mxu0
    %347 = vmatpush.bf16.msra.mxu0 %v285
    %348 = vmatpush.bf16.msra.mxu0 %v281
    %349 = vmatpush.bf16.msra.mxu0 %v277
    %350 = vmatpush.bf16.msra.mxu0 %v273
    %351 = vmatpush.bf16.msra.mxu0 %v269
    %352 = vmatpush.bf16.msra.mxu0 %v265
    %353 = vmatpush.bf16.msra.mxu0 %v261
    %354 = vmatpush.bf16.msra.mxu0 %v257
    %355 = vmatmul.bf16.gmra.mxu0 %v157
    %v356 = vpop.f32.mrf.mxu0
    %v357 = vadd.f32 0.0, %v356
    %v358 = vpop.f32.mrf.mxu0
    %v359 = vadd.f32 0.0, %v358
    %360 = vdwg.mxu0
    %361 = vmatpush.bf16.msra.mxu0 %v286
    %362 = vmatpush.bf16.msra.mxu0 %v282
    %363 = vmatpush.bf16.msra.mxu0 %v278
    %364 = vmatpush.bf16.msra.mxu0 %v274
    %365 = vmatpush.bf16.msra.mxu0 %v270
    %366 = vmatpush.bf16.msra.mxu0 %v266
    %367 = vmatpush.bf16.msra.mxu0 %v262
    %368 = vmatpush.bf16.msra.mxu0 %v258
    %369 = vmatmul.bf16.gmra.mxu0 %v157
    %v370 = vpop.f32.mrf.mxu0
    %v371 = vadd.f32 0.0, %v370
    %v372 = vpop.f32.mrf.mxu0
    %v373 = vadd.f32 0.0, %v372
    %374 = vdwg.mxu0
    %v375 = vadd.f32 %v329, %v331
    %v376 = vrot.slane %v375, 4
    %v377 = vadd.f32 %v375, %v376
    %v378 = vrot.slane %v377, 2
    %v379 = vadd.f32 %v377, %v378
    %v380 = vrot.slane %v379, 1
    %v381 = vadd.f32 %v379, %v380
    %v382 = vadd.f32 %v343, %v345
    %v383 = vrot.slane %v382, 4
    %v384 = vadd.f32 %v382, %v383
    %v385 = vrot.slane %v384, 2
    %v386 = vadd.f32 %v384, %v385
    %v387 = vrot.slane %v386, 1
    %v388 = vadd.f32 %v386, %v387
    %v389 = vadd.f32 %v357, %v359
    %v390 = vrot.slane %v389, 4
    %v391 = vadd.f32 %v389, %v390
    %v392 = vrot.slane %v391, 2
    %v393 = vadd.f32 %v391, %v392
    %v394 = vrot.slane %v393, 1
    %v395 = vadd.f32 %v393, %v394
    %v396 = vadd.f32 %v371, %v373
    %v397 = vrot.slane %v396, 4
    %v398 = vadd.f32 %v396, %v397
    %v399 = vrot.slane %v398, 2
    %v400 = vadd.f32 %v398, %v399
    %v401 = vrot.slane %v400, 1
    %v402 = vadd.f32 %v400, %v401
    %v403 = vmul.f32 %v381, 0.0625
    %v404 = vmul.f32 %v388, 0.0625
    %v405 = vmul.f32 %v395, 0.0625
    %v406 = vmul.f32 %v402, 0.0625
    %v407 = vmul.f32 %v329, %v329
    %v408 = vmul.f32 %v343, %v343
    %v409 = vmul.f32 %v357, %v357
    %v410 = vmul.f32 %v371, %v371
    %v411 = vmul.f32 %v331, %v331
    %v412 = vmul.f32 %v345, %v345
    %v413 = vmul.f32 %v359, %v359
    %v414 = vmul.f32 %v373, %v373
    %v415 = vadd.f32 %v407, %v411
    %v416 = vrot.slane %v415, 4
    %v417 = vadd.f32 %v415, %v416
    %v418 = vrot.slane %v417, 2
    %v419 = vadd.f32 %v417, %v418
    %v420 = vrot.slane %v419, 1
    %v421 = vadd.f32 %v419, %v420
    %v422 = vadd.f32 %v408, %v412
    %v423 = vrot.slane %v422, 4
    %v424 = vadd.f32 %v422, %v423
    %v425 = vrot.slane %v424, 2
    %v426 = vadd.f32 %v424, %v425
    %v427 = vrot.slane %v426, 1
    %v428 = vadd.f32 %v426, %v427
    %v429 = vadd.f32 %v409, %v413
    %v430 = vrot.slane %v429, 4
    %v431 = vadd.f32 %v429, %v430
    %v432 = vrot.slane %v431, 2
    %v433 = vadd.f32 %v431, %v432
    %v434 = vrot.slane %v433, 1
    %v435 = vadd.f32 %v433, %v434
    %v436 = vadd.f32 %v410, %v414
    %v437 = vrot.slane %v436, 4
    %v438 = vadd.f32 %v436, %v437
    %v439 = vrot.slane %v438, 2
    %v440 = vadd.f32 %v438, %v439
    %v441 = vrot.slane %v440, 1
    %v442 = vadd.f32 %v440, %v441
    %v443 = vmul.f32 %v421, 0.0625
    %v444 = vmul.f32 %v428, 0.0625
    %v445 = vmul.f32 %v435, 0.0625
    %v446 = vmul.f32 %v442, 0.0625
    %v447 = vmul.f32 %v403, %v403
    %v448 = vmul.f32 %v404, %v404
    %v449 = vmul.f32 %v405, %v405
    %v450 = vmul.f32 %v406, %v406
    %v451 = vsub.f32 %v443, %v447
    %v452 = vsub.f32 %v444, %v448
    %v453 = vsub.f32 %v445, %v449
    %v454 = vsub.f32 %v446, %v450
    %v455 = vmax.f32 %v451, 0.0
    %v456 = vmax.f32 %v452, 0.0
    %v457 = vmax.f32 %v453, 0.0
    %v458 = vmax.f32 %v454, 0.0
    %v459 = vadd.f32 %v455, 1e-05
    %v460 = vadd.f32 %v456, 1e-05
    %v461 = vadd.f32 %v457, 1e-05
    %v462 = vadd.f32 %v458, 1e-05
    %v463 = vrsqrt.pop %v459
    %v464 = vmul.f32 %v463, %v459
    %v465 = vmul.f32 %v464, %v463
    %v466 = vmul.f32 0.5, %v465
    %v467 = vsub.f32 1.5, %v466
    %v468 = vmul.f32 %v463, %v467
    %vm469 = vweird.f32 %v459
    %vm470 = vweird.f32 %v463
    %vm471 = vmor %vm469, %vm470
    %v472 = vsel %vm471, %v463, %v468
    %v473 = vrsqrt.pop %v460
    %v474 = vmul.f32 %v473, %v460
    %v475 = vmul.f32 %v474, %v473
    %v476 = vmul.f32 0.5, %v475
    %v477 = vsub.f32 1.5, %v476
    %v478 = vmul.f32 %v473, %v477
    %vm479 = vweird.f32 %v460
    %vm480 = vweird.f32 %v473
    %vm481 = vmor %vm479, %vm480
    %v482 = vsel %vm481, %v473, %v478
    %v483 = vrsqrt.pop %v461
    %v484 = vmul.f32 %v483, %v461
    %v485 = vmul.f32 %v484, %v483
    %v486 = vmul.f32 0.5, %v485
    %v487 = vsub.f32 1.5, %v486
    %v488 = vmul.f32 %v483, %v487
    %vm489 = vweird.f32 %v461
    %vm490 = vweird.f32 %v483
    %vm491 = vmor %vm489, %vm490
    %v492 = vsel %vm491, %v483, %v488
    %v493 = vrsqrt.pop %v462
    %v494 = vmul.f32 %v493, %v462
    %v495 = vmul.f32 %v494, %v493
    %v496 = vmul.f32 0.5, %v495
    %v497 = vsub.f32 1.5, %v496
    %v498 = vmul.f32 %v493, %v497
    %vm499 = vweird.f32 %v462
    %vm500 = vweird.f32 %v493
    %vm501 = vmor %vm499, %vm500
    %v502 = vsel %vm501, %v493, %v498
    %v507 = vrot.slane %v482, 7
    %v508 = vrot.slane %v492, 6
    %v509 = vrot.slane %v502, 5
    %vm510 = vcmask 1040384
    %v511 = vsel %vm510, %v472, %v507
    %vm512 = vcmask 1042434
    %v513 = vsel %vm512, %v508, %v509
    %vm514 = vcmask 1041408
    %v515 = vsel %vm514, %v511, %v513
    %v517 = vmul.f32 %v118, %v515
    %v519 = vperm.slane %v517, 0
    %v520 = vperm.slane %v517, 1
    %v521 = vperm.slane %v517, 2
    %v522 = vperm.slane %v517, 3
    %v527 = vmul.f32 %v403, %v519
    %v528 = vmul.f32 %v404, %v520
    %v529 = vmul.f32 %v405, %v521
    %v530 = vmul.f32 %v406, %v522
    %v535 = vrot.slane %v528, 7
    %v536 = vrot.slane %v529, 6
    %v537 = vrot.slane %v530, 5
    %v538 = vsel %vm510, %v527, %v535
    %v539 = vsel %vm512, %v536, %v537
    %v540 = vsel %vm514, %v538, %v539
    %v542 = vsub.f32 %v120, %v540
    %v543 = vmul.f32 %v329, %v519
    %v544 = vmul.f32 %v343, %v520
    %v545 = vmul.f32 %v357, %v521
    %v546 = vmul.f32 %v371, %v522
    %v547 = vmul.f32 %v331, %v519
    %v548 = vmul.f32 %v345, %v520
    %v549 = vmul.f32 %v359, %v521
    %v550 = vmul.f32 %v373, %v522
    %v552 = vperm.slane %v542, 0
    %v553 = vperm.slane %v542, 1
    %v554 = vperm.slane %v542, 2
    %v555 = vperm.slane %v542, 3
    %v560 = vadd.f32 %v543, %v552
    %v561 = vadd.f32 %v544, %v553
    %v562 = vadd.f32 %v545, %v554
    %v563 = vadd.f32 %v546, %v555
    %v564 = vadd.f32 %v547, %v552
    %v565 = vadd.f32 %v548, %v553
    %v566 = vadd.f32 %v549, %v554
    %v567 = vadd.f32 %v550, %v555
    %v568 = vmax.f32 %v560, 0.0
    %v569 = vmax.f32 %v561, 0.0
    %v570 = vmax.f32 %v562, 0.0
    %v571 = vmax.f32 %v563, 0.0
    %v572 = vmax.f32 %v564, 0.0
    %v573 = vmax.f32 %v565, 0.0
    %v574 = vmax.f32 %v566, 0.0
    %v575 = vmax.f32 %v567, 0.0
    %v576 = vpack.c.bf16 %v572, %v568
    %v577 = vpack.c.bf16 %v573, %v569
    %v578 = vpack.c.bf16 %v574, %v570
    %v579 = vpack.c.bf16 %v575, %v571
    %s580 = scalar_lea.vmem [#allocation11], 8
    %v581 = vld [vmem:[%s580] ss:$2 sm:$0x3]
    %s582 = scalar_lea.vmem [#allocation11], 9
    %v583 = vld [vmem:[%s582] ss:$2 sm:$0x3]
    %v584 = vld [vmem:[#allocation7] sm:$0xff]
    %v585 = vld [vmem:[#allocation7 + $0x8] sm:$0xff]
    %v586 = vld [vmem:[#allocation7 + $0x10] sm:$0xff]
    %v587 = vld [vmem:[#allocation7 + $0x18] sm:$0xff]
    %v588 = vld [vmem:[#allocation7 + $0x20] sm:$0xff]
    %v589 = vld [vmem:[#allocation7 + $0x28] sm:$0xff]
    %v590 = vld [vmem:[#allocation7 + $0x30] sm:$0xff]
    %v591 = vld [vmem:[#allocation7 + $0x38] sm:$0xff]
    %v592 = vld [vmem:[#allocation7 + $0x40] sm:$0xff]
    %v593 = vld [vmem:[#allocation7 + $0x48] sm:$0xff]
    %v594 = vld [vmem:[#allocation7 + $0x50] sm:$0xff]
    %v595 = vld [vmem:[#allocation7 + $0x58] sm:$0xff]
    %v596 = vld [vmem:[#allocation7 + $0x60] sm:$0xff]
    %v597 = vld [vmem:[#allocation7 + $0x68] sm:$0xff]
    %v598 = vld [vmem:[#allocation7 + $0x70] sm:$0xff]
    %v599 = vld [vmem:[#allocation7 + $0x78] sm:$0xff]
    %v600 = vld [vmem:[#allocation7 + $0x80] sm:$0xff]
    %v601 = vld [vmem:[#allocation7 + $0x88] sm:$0xff]
    %v602 = vld [vmem:[#allocation7 + $0x90] sm:$0xff]
    %v603 = vld [vmem:[#allocation7 + $0x98] sm:$0xff]
    %v604 = vld [vmem:[#allocation7 + $0xa0] sm:$0xff]
    %v605 = vld [vmem:[#allocation7 + $0xa8] sm:$0xff]
    %v606 = vld [vmem:[#allocation7 + $0xb0] sm:$0xff]
    %v607 = vld [vmem:[#allocation7 + $0xb8] sm:$0xff]
    %v608 = vld [vmem:[#allocation7 + $0xc0] sm:$0xff]
    %v609 = vld [vmem:[#allocation7 + $0xc8] sm:$0xff]
    %v610 = vld [vmem:[#allocation7 + $0xd0] sm:$0xff]
    %v611 = vld [vmem:[#allocation7 + $0xd8] sm:$0xff]
    %v612 = vld [vmem:[#allocation7 + $0xe0] sm:$0xff]
    %v613 = vld [vmem:[#allocation7 + $0xe8] sm:$0xff]
    %v614 = vld [vmem:[#allocation7 + $0xf0] sm:$0xff]
    %v615 = vld [vmem:[#allocation7 + $0xf8] sm:$0xff]
    %v616 = vld [vmem:[#allocation7 + $0x100] sm:$0xff]
    %v617 = vld [vmem:[#allocation7 + $0x108] sm:$0xff]
    %v618 = vld [vmem:[#allocation7 + $0x110] sm:$0xff]
    %v619 = vld [vmem:[#allocation7 + $0x118] sm:$0xff]
    %v620 = vld [vmem:[#allocation7 + $0x120] sm:$0xff]
    %v621 = vld [vmem:[#allocation7 + $0x128] sm:$0xff]
    %v622 = vld [vmem:[#allocation7 + $0x130] sm:$0xff]
    %v623 = vld [vmem:[#allocation7 + $0x138] sm:$0xff]
    %v624 = vld [vmem:[#allocation7 + $0x140] sm:$0xff]
    %v625 = vld [vmem:[#allocation7 + $0x148] sm:$0xff]
    %v626 = vld [vmem:[#allocation7 + $0x150] sm:$0xff]
    %v627 = vld [vmem:[#allocation7 + $0x158] sm:$0xff]
    %v628 = vld [vmem:[#allocation7 + $0x160] sm:$0xff]
    %v629 = vld [vmem:[#allocation7 + $0x168] sm:$0xff]
    %v630 = vld [vmem:[#allocation7 + $0x170] sm:$0xff]
    %v631 = vld [vmem:[#allocation7 + $0x178] sm:$0xff]
    %v632 = vld [vmem:[#allocation7 + $0x180] sm:$0xff]
    %v633 = vld [vmem:[#allocation7 + $0x188] sm:$0xff]
    %v634 = vld [vmem:[#allocation7 + $0x190] sm:$0xff]
    %v635 = vld [vmem:[#allocation7 + $0x198] sm:$0xff]
    %v636 = vld [vmem:[#allocation7 + $0x1a0] sm:$0xff]
    %v637 = vld [vmem:[#allocation7 + $0x1a8] sm:$0xff]
    %v638 = vld [vmem:[#allocation7 + $0x1b0] sm:$0xff]
    %v639 = vld [vmem:[#allocation7 + $0x1b8] sm:$0xff]
    %v640 = vld [vmem:[#allocation7 + $0x1c0] sm:$0xff]
    %v641 = vld [vmem:[#allocation7 + $0x1c8] sm:$0xff]
    %v642 = vld [vmem:[#allocation7 + $0x1d0] sm:$0xff]
    %v643 = vld [vmem:[#allocation7 + $0x1d8] sm:$0xff]
    %v644 = vld [vmem:[#allocation7 + $0x1e0] sm:$0xff]
    %v645 = vld [vmem:[#allocation7 + $0x1e8] sm:$0xff]
    %v646 = vld [vmem:[#allocation7 + $0x1f0] sm:$0xff]
    %v647 = vld [vmem:[#allocation7 + $0x1f8] sm:$0xff]
    %v712 = vunpack.c.l.b16 %v584
    %v713 = vunpack.c.h.b16 %v584
    %v714 = vunpack.c.l.b16 %v585
    %v715 = vunpack.c.h.b16 %v585
    %v716 = vunpack.c.l.b16 %v586
    %v717 = vunpack.c.h.b16 %v586
    %v718 = vunpack.c.l.b16 %v587
    %v719 = vunpack.c.h.b16 %v587
    %v720 = vunpack.c.l.b16 %v588
    %v721 = vunpack.c.h.b16 %v588
    %v722 = vunpack.c.l.b16 %v589
    %v723 = vunpack.c.h.b16 %v589
    %v724 = vunpack.c.l.b16 %v590
    %v725 = vunpack.c.h.b16 %v590
    %v726 = vunpack.c.l.b16 %v591
    %v727 = vunpack.c.h.b16 %v591
    %v728 = vunpack.c.l.b16 %v592
    %v729 = vunpack.c.h.b16 %v592
    %v730 = vunpack.c.l.b16 %v593
    %v731 = vunpack.c.h.b16 %v593
    %v732 = vunpack.c.l.b16 %v594
    %v733 = vunpack.c.h.b16 %v594
    %v734 = vunpack.c.l.b16 %v595
    %v735 = vunpack.c.h.b16 %v595
    %v736 = vunpack.c.l.b16 %v596
    %v737 = vunpack.c.h.b16 %v596
    %v738 = vunpack.c.l.b16 %v597
    %v739 = vunpack.c.h.b16 %v597
    %v740 = vunpack.c.l.b16 %v598
    %v741 = vunpack.c.h.b16 %v598
    %v742 = vunpack.c.l.b16 %v599
    %v743 = vunpack.c.h.b16 %v599
    %v744 = vunpack.c.l.b16 %v600
    %v745 = vunpack.c.h.b16 %v600
    %v746 = vunpack.c.l.b16 %v601
    %v747 = vunpack.c.h.b16 %v601
    %v748 = vunpack.c.l.b16 %v602
    %v749 = vunpack.c.h.b16 %v602
    %v750 = vunpack.c.l.b16 %v603
    %v751 = vunpack.c.h.b16 %v603
    %v752 = vunpack.c.l.b16 %v604
    %v753 = vunpack.c.h.b16 %v604
    %v754 = vunpack.c.l.b16 %v605
    %v755 = vunpack.c.h.b16 %v605
    %v756 = vunpack.c.l.b16 %v606
    %v757 = vunpack.c.h.b16 %v606
    %v758 = vunpack.c.l.b16 %v607
    %v759 = vunpack.c.h.b16 %v607
    %v760 = vunpack.c.l.b16 %v608
    %v761 = vunpack.c.h.b16 %v608
    %v762 = vunpack.c.l.b16 %v609
    %v763 = vunpack.c.h.b16 %v609
    %v764 = vunpack.c.l.b16 %v610
    %v765 = vunpack.c.h.b16 %v610
    %v766 = vunpack.c.l.b16 %v611
    %v767 = vunpack.c.h.b16 %v611
    %v768 = vunpack.c.l.b16 %v612
    %v769 = vunpack.c.h.b16 %v612
    %v770 = vunpack.c.l.b16 %v613
    %v771 = vunpack.c.h.b16 %v613
    %v772 = vunpack.c.l.b16 %v614
    %v773 = vunpack.c.h.b16 %v614
    %v774 = vunpack.c.l.b16 %v615
    %v775 = vunpack.c.h.b16 %v615
    %v776 = vunpack.c.l.b16 %v616
    %v777 = vunpack.c.h.b16 %v616
    %v778 = vunpack.c.l.b16 %v617
    %v779 = vunpack.c.h.b16 %v617
    %v780 = vunpack.c.l.b16 %v618
    %v781 = vunpack.c.h.b16 %v618
    %v782 = vunpack.c.l.b16 %v619
    %v783 = vunpack.c.h.b16 %v619
    %v784 = vunpack.c.l.b16 %v620
    %v785 = vunpack.c.h.b16 %v620
    %v786 = vunpack.c.l.b16 %v621
    %v787 = vunpack.c.h.b16 %v621
    %v788 = vunpack.c.l.b16 %v622
    %v789 = vunpack.c.h.b16 %v622
    %v790 = vunpack.c.l.b16 %v623
    %v791 = vunpack.c.h.b16 %v623
    %v792 = vunpack.c.l.b16 %v624
    %v793 = vunpack.c.h.b16 %v624
    %v794 = vunpack.c.l.b16 %v625
    %v795 = vunpack.c.h.b16 %v625
    %v796 = vunpack.c.l.b16 %v626
    %v797 = vunpack.c.h.b16 %v626
    %v798 = vunpack.c.l.b16 %v627
    %v799 = vunpack.c.h.b16 %v627
    %v800 = vunpack.c.l.b16 %v628
    %v801 = vunpack.c.h.b16 %v628
    %v802 = vunpack.c.l.b16 %v629
    %v803 = vunpack.c.h.b16 %v629
    %v804 = vunpack.c.l.b16 %v630
    %v805 = vunpack.c.h.b16 %v630
    %v806 = vunpack.c.l.b16 %v631
    %v807 = vunpack.c.h.b16 %v631
    %v808 = vunpack.c.l.b16 %v632
    %v809 = vunpack.c.h.b16 %v632
    %v810 = vunpack.c.l.b16 %v633
    %v811 = vunpack.c.h.b16 %v633
    %v812 = vunpack.c.l.b16 %v634
    %v813 = vunpack.c.h.b16 %v634
    %v814 = vunpack.c.l.b16 %v635
    %v815 = vunpack.c.h.b16 %v635
    %v816 = vunpack.c.l.b16 %v636
    %v817 = vunpack.c.h.b16 %v636
    %v818 = vunpack.c.l.b16 %v637
    %v819 = vunpack.c.h.b16 %v637
    %v820 = vunpack.c.l.b16 %v638
    %v821 = vunpack.c.h.b16 %v638
    %v822 = vunpack.c.l.b16 %v639
    %v823 = vunpack.c.h.b16 %v639
    %v824 = vunpack.c.l.b16 %v640
    %v825 = vunpack.c.h.b16 %v640
    %v826 = vunpack.c.l.b16 %v641
    %v827 = vunpack.c.h.b16 %v641
    %v828 = vunpack.c.l.b16 %v642
    %v829 = vunpack.c.h.b16 %v642
    %v830 = vunpack.c.l.b16 %v643
    %v831 = vunpack.c.h.b16 %v643
    %v832 = vunpack.c.l.b16 %v644
    %v833 = vunpack.c.h.b16 %v644
    %v834 = vunpack.c.l.b16 %v645
    %v835 = vunpack.c.h.b16 %v645
    %v836 = vunpack.c.l.b16 %v646
    %v837 = vunpack.c.h.b16 %v646
    %v838 = vunpack.c.l.b16 %v647
    %v839 = vunpack.c.h.b16 %v647
    %v840 = vpack.c.b16 %v714, %v712
    %v841 = vpack.c.b16 %v715, %v713
    %v842 = vpack.c.b16 %v718, %v716
    %v843 = vpack.c.b16 %v719, %v717
    %v844 = vpack.c.b16 %v722, %v720
    %v845 = vpack.c.b16 %v723, %v721
    %v846 = vpack.c.b16 %v726, %v724
    %v847 = vpack.c.b16 %v727, %v725
    %v848 = vpack.c.b16 %v730, %v728
    %v849 = vpack.c.b16 %v731, %v729
    %v850 = vpack.c.b16 %v734, %v732
    %v851 = vpack.c.b16 %v735, %v733
    %v852 = vpack.c.b16 %v738, %v736
    %v853 = vpack.c.b16 %v739, %v737
    %v854 = vpack.c.b16 %v742, %v740
    %v855 = vpack.c.b16 %v743, %v741
    %v856 = vpack.c.b16 %v746, %v744
    %v857 = vpack.c.b16 %v747, %v745
    %v858 = vpack.c.b16 %v750, %v748
    %v859 = vpack.c.b16 %v751, %v749
    %v860 = vpack.c.b16 %v754, %v752
    %v861 = vpack.c.b16 %v755, %v753
    %v862 = vpack.c.b16 %v758, %v756
    %v863 = vpack.c.b16 %v759, %v757
    %v864 = vpack.c.b16 %v762, %v760
    %v865 = vpack.c.b16 %v763, %v761
    %v866 = vpack.c.b16 %v766, %v764
    %v867 = vpack.c.b16 %v767, %v765
    %v868 = vpack.c.b16 %v770, %v768
    %v869 = vpack.c.b16 %v771, %v769
    %v870 = vpack.c.b16 %v774, %v772
    %v871 = vpack.c.b16 %v775, %v773
    %v872 = vpack.c.b16 %v778, %v776
    %v873 = vpack.c.b16 %v779, %v777
    %v874 = vpack.c.b16 %v782, %v780
    %v875 = vpack.c.b16 %v783, %v781
    %v876 = vpack.c.b16 %v786, %v784
    %v877 = vpack.c.b16 %v787, %v785
    %v878 = vpack.c.b16 %v790, %v788
    %v879 = vpack.c.b16 %v791, %v789
    %v880 = vpack.c.b16 %v794, %v792
    %v881 = vpack.c.b16 %v795, %v793
    %v882 = vpack.c.b16 %v798, %v796
    %v883 = vpack.c.b16 %v799, %v797
    %v884 = vpack.c.b16 %v802, %v800
    %v885 = vpack.c.b16 %v803, %v801
    %v886 = vpack.c.b16 %v806, %v804
    %v887 = vpack.c.b16 %v807, %v805
    %v888 = vpack.c.b16 %v810, %v808
    %v889 = vpack.c.b16 %v811, %v809
    %v890 = vpack.c.b16 %v814, %v812
    %v891 = vpack.c.b16 %v815, %v813
    %v892 = vpack.c.b16 %v818, %v816
    %v893 = vpack.c.b16 %v819, %v817
    %v894 = vpack.c.b16 %v822, %v820
    %v895 = vpack.c.b16 %v823, %v821
    %v896 = vpack.c.b16 %v826, %v824
    %v897 = vpack.c.b16 %v827, %v825
    %v898 = vpack.c.b16 %v830, %v828
    %v899 = vpack.c.b16 %v831, %v829
    %v900 = vpack.c.b16 %v834, %v832
    %v901 = vpack.c.b16 %v835, %v833
    %v902 = vpack.c.b16 %v838, %v836
    %v903 = vpack.c.b16 %v839, %v837
    %968 = vmatpush.bf16.msra.mxu0 %v854
    %969 = vmatpush.bf16.msra.mxu0 %v852
    %970 = vmatpush.bf16.msra.mxu0 %v850
    %971 = vmatpush.bf16.msra.mxu0 %v848
    %972 = vmatpush.bf16.msra.mxu0 %v846
    %973 = vmatpush.bf16.msra.mxu0 %v844
    %974 = vmatpush.bf16.msra.mxu0 %v842
    %975 = vmatpush.bf16.msra.mxu0 %v840
    %976 = vmatmul.bf16.gmra.mxu0 %v576
    %v977 = vpop.f32.mrf.mxu0
    %v978 = vadd.f32 0.0, %v977
    %v979 = vpop.f32.mrf.mxu0
    %v980 = vadd.f32 0.0, %v979
    %981 = vdwg.mxu0
    %982 = vmatpush.bf16.msra.mxu0 %v870
    %983 = vmatpush.bf16.msra.mxu0 %v868
    %984 = vmatpush.bf16.msra.mxu0 %v866
    %985 = vmatpush.bf16.msra.mxu0 %v864
    %986 = vmatpush.bf16.msra.mxu0 %v862
    %987 = vmatpush.bf16.msra.mxu0 %v860
    %988 = vmatpush.bf16.msra.mxu0 %v858
    %989 = vmatpush.bf16.msra.mxu0 %v856
    %990 = vmatmul.bf16.gmra.mxu0 %v577
    %v991 = vpop.f32.mrf.mxu0
    %v992 = vadd.f32 %v978, %v991
    %v993 = vpop.f32.mrf.mxu0
    %v994 = vadd.f32 %v980, %v993
    %995 = vdwg.mxu0
    %996 = vmatpush.bf16.msra.mxu0 %v886
    %997 = vmatpush.bf16.msra.mxu0 %v884
    %998 = vmatpush.bf16.msra.mxu0 %v882
    %999 = vmatpush.bf16.msra.mxu0 %v880
    %1000 = vmatpush.bf16.msra.mxu0 %v878
    %1001 = vmatpush.bf16.msra.mxu0 %v876
    %1002 = vmatpush.bf16.msra.mxu0 %v874
    %1003 = vmatpush.bf16.msra.mxu0 %v872
    %1004 = vmatmul.bf16.gmra.mxu0 %v578
    %v1005 = vpop.f32.mrf.mxu0
    %v1006 = vadd.f32 %v992, %v1005
    %v1007 = vpop.f32.mrf.mxu0
    %v1008 = vadd.f32 %v994, %v1007
    %1009 = vdwg.mxu0
    %1010 = vmatpush.bf16.msra.mxu0 %v902
    %1011 = vmatpush.bf16.msra.mxu0 %v900
    %1012 = vmatpush.bf16.msra.mxu0 %v898
    %1013 = vmatpush.bf16.msra.mxu0 %v896
    %1014 = vmatpush.bf16.msra.mxu0 %v894
    %1015 = vmatpush.bf16.msra.mxu0 %v892
    %1016 = vmatpush.bf16.msra.mxu0 %v890
    %1017 = vmatpush.bf16.msra.mxu0 %v888
    %1018 = vmatmul.bf16.gmra.mxu0 %v579
    %v1019 = vpop.f32.mrf.mxu0
    %v1020 = vadd.f32 %v1006, %v1019
    %v1021 = vpop.f32.mrf.mxu0
    %v1022 = vadd.f32 %v1008, %v1021
    %1023 = vdwg.mxu0
    %1024 = vmatpush.bf16.msra.mxu0 %v855
    %1025 = vmatpush.bf16.msra.mxu0 %v853
    %1026 = vmatpush.bf16.msra.mxu0 %v851
    %1027 = vmatpush.bf16.msra.mxu0 %v849
    %1028 = vmatpush.bf16.msra.mxu0 %v847
    %1029 = vmatpush.bf16.msra.mxu0 %v845
    %1030 = vmatpush.bf16.msra.mxu0 %v843
    %1031 = vmatpush.bf16.msra.mxu0 %v841
    %1032 = vmatmul.bf16.gmra.mxu0 %v576
    %v1033 = vpop.f32.mrf.mxu0
    %v1034 = vadd.f32 0.0, %v1033
    %v1035 = vpop.f32.mrf.mxu0
    %v1036 = vadd.f32 0.0, %v1035
    %1037 = vdwg.mxu0
    %1038 = vmatpush.bf16.msra.mxu0 %v871
    %1039 = vmatpush.bf16.msra.mxu0 %v869
    %1040 = vmatpush.bf16.msra.mxu0 %v867
    %1041 = vmatpush.bf16.msra.mxu0 %v865
    %1042 = vmatpush.bf16.msra.mxu0 %v863
    %1043 = vmatpush.bf16.msra.mxu0 %v861
    %1044 = vmatpush.bf16.msra.mxu0 %v859
    %1045 = vmatpush.bf16.msra.mxu0 %v857
    %1046 = vmatmul.bf16.gmra.mxu0 %v577
    %v1047 = vpop.f32.mrf.mxu0
    %v1048 = vadd.f32 %v1034, %v1047
    %v1049 = vpop.f32.mrf.mxu0
    %v1050 = vadd.f32 %v1036, %v1049
    %1051 = vdwg.mxu0
    %1052 = vmatpush.bf16.msra.mxu0 %v887
    %1053 = vmatpush.bf16.msra.mxu0 %v885
    %1054 = vmatpush.bf16.msra.mxu0 %v883
    %1055 = vmatpush.bf16.msra.mxu0 %v881
    %1056 = vmatpush.bf16.msra.mxu0 %v879
    %1057 = vmatpush.bf16.msra.mxu0 %v877
    %1058 = vmatpush.bf16.msra.mxu0 %v875
    %1059 = vmatpush.bf16.msra.mxu0 %v873
    %1060 = vmatmul.bf16.gmra.mxu0 %v578
    %v1061 = vpop.f32.mrf.mxu0
    %v1062 = vadd.f32 %v1048, %v1061
    %v1063 = vpop.f32.mrf.mxu0
    %v1064 = vadd.f32 %v1050, %v1063
    %1065 = vdwg.mxu0
    %1066 = vmatpush.bf16.msra.mxu0 %v903
    %1067 = vmatpush.bf16.msra.mxu0 %v901
    %1068 = vmatpush.bf16.msra.mxu0 %v899
    %1069 = vmatpush.bf16.msra.mxu0 %v897
    %1070 = vmatpush.bf16.msra.mxu0 %v895
    %1071 = vmatpush.bf16.msra.mxu0 %v893
    %1072 = vmatpush.bf16.msra.mxu0 %v891
    %1073 = vmatpush.bf16.msra.mxu0 %v889
    %1074 = vmatmul.bf16.gmra.mxu0 %v579
    %v1075 = vpop.f32.mrf.mxu0
    %v1076 = vadd.f32 %v1062, %v1075
    %v1077 = vpop.f32.mrf.mxu0
    %v1078 = vadd.f32 %v1064, %v1077
    %1079 = vdwg.mxu0
    %v1080 = vadd.f32 %v1020, %v1022
    %v1081 = vrot.slane %v1080, 4
    %v1082 = vadd.f32 %v1080, %v1081
    %v1083 = vrot.slane %v1082, 2
    %v1084 = vadd.f32 %v1082, %v1083
    %v1085 = vrot.slane %v1084, 1
    %v1086 = vadd.f32 %v1084, %v1085
    %v1087 = vadd.f32 %v1076, %v1078
    %v1088 = vrot.slane %v1087, 4
    %v1089 = vadd.f32 %v1087, %v1088
    %v1090 = vrot.slane %v1089, 2
    %v1091 = vadd.f32 %v1089, %v1090
    %v1092 = vrot.slane %v1091, 1
    %v1093 = vadd.f32 %v1091, %v1092
    %v1094 = vmul.f32 %v1086, 0.0625
    %v1095 = vmul.f32 %v1093, 0.0625
    %v1096 = vmul.f32 %v1020, %v1020
    %v1097 = vmul.f32 %v1076, %v1076
    %v1098 = vmul.f32 %v1022, %v1022
    %v1099 = vmul.f32 %v1078, %v1078
    %v1100 = vadd.f32 %v1096, %v1098
    %v1101 = vrot.slane %v1100, 4
    %v1102 = vadd.f32 %v1100, %v1101
    %v1103 = vrot.slane %v1102, 2
    %v1104 = vadd.f32 %v1102, %v1103
    %v1105 = vrot.slane %v1104, 1
    %v1106 = vadd.f32 %v1104, %v1105
    %v1107 = vadd.f32 %v1097, %v1099
    %v1108 = vrot.slane %v1107, 4
    %v1109 = vadd.f32 %v1107, %v1108
    %v1110 = vrot.slane %v1109, 2
    %v1111 = vadd.f32 %v1109, %v1110
    %v1112 = vrot.slane %v1111, 1
    %v1113 = vadd.f32 %v1111, %v1112
    %v1114 = vmul.f32 %v1106, 0.0625
    %v1115 = vmul.f32 %v1113, 0.0625
    %v1116 = vmul.f32 %v1094, %v1094
    %v1117 = vmul.f32 %v1095, %v1095
    %v1118 = vsub.f32 %v1114, %v1116
    %v1119 = vsub.f32 %v1115, %v1117
    %v1120 = vmax.f32 %v1118, 0.0
    %v1121 = vmax.f32 %v1119, 0.0
    %v1122 = vadd.f32 %v1120, 1e-05
    %v1123 = vadd.f32 %v1121, 1e-05
    %v1124 = vrsqrt.pop %v1122
    %v1125 = vmul.f32 %v1124, %v1122
    %v1126 = vmul.f32 %v1125, %v1124
    %v1127 = vmul.f32 0.5, %v1126
    %v1128 = vsub.f32 1.5, %v1127
    %v1129 = vmul.f32 %v1124, %v1128
    %vm1130 = vweird.f32 %v1122
    %vm1131 = vweird.f32 %v1124
    %vm1132 = vmor %vm1130, %vm1131
    %v1133 = vsel %vm1132, %v1124, %v1129
    %v1134 = vrsqrt.pop %v1123
    %v1135 = vmul.f32 %v1134, %v1123
    %v1136 = vmul.f32 %v1135, %v1134
    %v1137 = vmul.f32 0.5, %v1136
    %v1138 = vsub.f32 1.5, %v1137
    %v1139 = vmul.f32 %v1134, %v1138
    %vm1140 = vweird.f32 %v1123
    %vm1141 = vweird.f32 %v1134
    %vm1142 = vmor %vm1140, %vm1141
    %v1143 = vsel %vm1142, %v1134, %v1139
    %v1146 = vrot.slane %v1143, 7
    %v1147 = vsel %vm510, %v1133, %v1146
    %v1149 = vmul.f32 %v581, %v1147
    %v1151 = vperm.slane %v1149, 0
    %v1152 = vperm.slane %v1149, 1
    %v1155 = vmul.f32 %v1094, %v1151
    %v1156 = vmul.f32 %v1095, %v1152
    %v1159 = vrot.slane %v1156, 7
    %v1160 = vsel %vm510, %v1155, %v1159
    %v1162 = vsub.f32 %v583, %v1160
    %v1163 = vmul.f32 %v1020, %v1151
    %v1164 = vmul.f32 %v1076, %v1152
    %v1165 = vmul.f32 %v1022, %v1151
    %v1166 = vmul.f32 %v1078, %v1152
    %v1168 = vperm.slane %v1162, 0
    %v1169 = vperm.slane %v1162, 1
    %v1172 = vadd.f32 %v1163, %v1168
    %v1173 = vadd.f32 %v1164, %v1169
    %v1174 = vadd.f32 %v1165, %v1168
    %v1175 = vadd.f32 %v1166, %v1169
    %v1176 = vmax.f32 %v1172, 0.0
    %v1177 = vmax.f32 %v1173, 0.0
    %v1178 = vmax.f32 %v1174, 0.0
    %v1179 = vmax.f32 %v1175, 0.0
    %v1180 = vpack.c.bf16 %v1178, %v1176
    %v1181 = vpack.c.bf16 %v1179, %v1177
    %v1182 = vld [vmem:[#allocation11 + $0xc] sm:$0x1]
    %v1183 = vld [vmem:[#allocation11 + $0xd] sm:$0x1]
    %v1184 = vld [vmem:[#allocation8] sm:$0xf]
    %v1185 = vld [vmem:[#allocation8 + $0x4] sm:$0xf]
    %v1186 = vld [vmem:[#allocation8 + $0x8] sm:$0xf]
    %v1187 = vld [vmem:[#allocation8 + $0xc] sm:$0xf]
    %v1188 = vld [vmem:[#allocation8 + $0x10] sm:$0xf]
    %v1189 = vld [vmem:[#allocation8 + $0x14] sm:$0xf]
    %v1190 = vld [vmem:[#allocation8 + $0x18] sm:$0xf]
    %v1191 = vld [vmem:[#allocation8 + $0x1c] sm:$0xf]
    %v1192 = vld [vmem:[#allocation8 + $0x20] sm:$0xf]
    %v1193 = vld [vmem:[#allocation8 + $0x24] sm:$0xf]
    %v1194 = vld [vmem:[#allocation8 + $0x28] sm:$0xf]
    %v1195 = vld [vmem:[#allocation8 + $0x2c] sm:$0xf]
    %v1196 = vld [vmem:[#allocation8 + $0x30] sm:$0xf]
    %v1197 = vld [vmem:[#allocation8 + $0x34] sm:$0xf]
    %v1198 = vld [vmem:[#allocation8 + $0x38] sm:$0xf]
    %v1199 = vld [vmem:[#allocation8 + $0x3c] sm:$0xf]
    %v1200 = vld [vmem:[#allocation8 + $0x40] sm:$0xf]
    %v1201 = vld [vmem:[#allocation8 + $0x44] sm:$0xf]
    %v1202 = vld [vmem:[#allocation8 + $0x48] sm:$0xf]
    %v1203 = vld [vmem:[#allocation8 + $0x4c] sm:$0xf]
    %v1204 = vld [vmem:[#allocation8 + $0x50] sm:$0xf]
    %v1205 = vld [vmem:[#allocation8 + $0x54] sm:$0xf]
    %v1206 = vld [vmem:[#allocation8 + $0x58] sm:$0xf]
    %v1207 = vld [vmem:[#allocation8 + $0x5c] sm:$0xf]
    %v1208 = vld [vmem:[#allocation8 + $0x60] sm:$0xf]
    %v1209 = vld [vmem:[#allocation8 + $0x64] sm:$0xf]
    %v1210 = vld [vmem:[#allocation8 + $0x68] sm:$0xf]
    %v1211 = vld [vmem:[#allocation8 + $0x6c] sm:$0xf]
    %v1212 = vld [vmem:[#allocation8 + $0x70] sm:$0xf]
    %v1213 = vld [vmem:[#allocation8 + $0x74] sm:$0xf]
    %v1214 = vld [vmem:[#allocation8 + $0x78] sm:$0xf]
    %v1215 = vld [vmem:[#allocation8 + $0x7c] sm:$0xf]
    %v1248 = vunpack.c.l.b16 %v1184
    %v1249 = vunpack.c.l.b16 %v1185
    %v1250 = vunpack.c.l.b16 %v1186
    %v1251 = vunpack.c.l.b16 %v1187
    %v1252 = vunpack.c.l.b16 %v1188
    %v1253 = vunpack.c.l.b16 %v1189
    %v1254 = vunpack.c.l.b16 %v1190
    %v1255 = vunpack.c.l.b16 %v1191
    %v1256 = vunpack.c.l.b16 %v1192
    %v1257 = vunpack.c.l.b16 %v1193
    %v1258 = vunpack.c.l.b16 %v1194
    %v1259 = vunpack.c.l.b16 %v1195
    %v1260 = vunpack.c.l.b16 %v1196
    %v1261 = vunpack.c.l.b16 %v1197
    %v1262 = vunpack.c.l.b16 %v1198
    %v1263 = vunpack.c.l.b16 %v1199
    %v1264 = vunpack.c.l.b16 %v1200
    %v1265 = vunpack.c.l.b16 %v1201
    %v1266 = vunpack.c.l.b16 %v1202
    %v1267 = vunpack.c.l.b16 %v1203
    %v1268 = vunpack.c.l.b16 %v1204
    %v1269 = vunpack.c.l.b16 %v1205
    %v1270 = vunpack.c.l.b16 %v1206
    %v1271 = vunpack.c.l.b16 %v1207
    %v1272 = vunpack.c.l.b16 %v1208
    %v1273 = vunpack.c.l.b16 %v1209
    %v1274 = vunpack.c.l.b16 %v1210
    %v1275 = vunpack.c.l.b16 %v1211
    %v1276 = vunpack.c.l.b16 %v1212
    %v1277 = vunpack.c.l.b16 %v1213
    %v1278 = vunpack.c.l.b16 %v1214
    %v1279 = vunpack.c.l.b16 %v1215
    %v1280 = vpack.c.b16 %v1249, %v1248
    %v1281 = vpack.c.b16 %v1251, %v1250
    %v1282 = vpack.c.b16 %v1253, %v1252
    %v1283 = vpack.c.b16 %v1255, %v1254
    %v1284 = vpack.c.b16 %v1257, %v1256
    %v1285 = vpack.c.b16 %v1259, %v1258
    %v1286 = vpack.c.b16 %v1261, %v1260
    %v1287 = vpack.c.b16 %v1263, %v1262
    %v1288 = vpack.c.b16 %v1265, %v1264
    %v1289 = vpack.c.b16 %v1267, %v1266
    %v1290 = vpack.c.b16 %v1269, %v1268
    %v1291 = vpack.c.b16 %v1271, %v1270
    %v1292 = vpack.c.b16 %v1273, %v1272
    %v1293 = vpack.c.b16 %v1275, %v1274
    %v1294 = vpack.c.b16 %v1277, %v1276
    %v1295 = vpack.c.b16 %v1279, %v1278
    %1312 = vmatpush.bf16.msra.mxu0 %v1287
    %1313 = vmatpush.bf16.msra.mxu0 %v1286
    %1314 = vmatpush.bf16.msra.mxu0 %v1285
    %1315 = vmatpush.bf16.msra.mxu0 %v1284
    %1316 = vmatpush.bf16.msra.mxu0 %v1283
    %1317 = vmatpush.bf16.msra.mxu0 %v1282
    %1318 = vmatpush.bf16.msra.mxu0 %v1281
    %1319 = vmatpush.bf16.msra.mxu0 %v1280
    %1320 = vmatmul.bf16.gmra.mxu0 %v1180
    %v1321 = vpop.f32.mrf.mxu0
    %v1322 = vadd.f32 0.0, %v1321
    %v1323 = vpop.f32.mrf.mxu0
    %v1324 = vadd.f32 0.0, %v1323
    %1325 = vdwg.mxu0
    %1326 = vmatpush.bf16.msra.mxu0 %v1295
    %1327 = vmatpush.bf16.msra.mxu0 %v1294
    %1328 = vmatpush.bf16.msra.mxu0 %v1293
    %1329 = vmatpush.bf16.msra.mxu0 %v1292
    %1330 = vmatpush.bf16.msra.mxu0 %v1291
    %1331 = vmatpush.bf16.msra.mxu0 %v1290
    %1332 = vmatpush.bf16.msra.mxu0 %v1289
    %1333 = vmatpush.bf16.msra.mxu0 %v1288
    %1334 = vmatmul.bf16.gmra.mxu0 %v1181
    %v1335 = vpop.f32.mrf.mxu0
    %v1336 = vadd.f32 %v1322, %v1335
    %v1337 = vpop.f32.mrf.mxu0
    %v1338 = vadd.f32 %v1324, %v1337
    %1339 = vdwg.mxu0
    %v1340 = vadd.f32 %v1336, %v1338
    %v1341 = vrot.slane %v1340, 4
    %v1342 = vadd.f32 %v1340, %v1341
    %v1343 = vrot.slane %v1342, 2
    %v1344 = vadd.f32 %v1342, %v1343
    %v1345 = vrot.slane %v1344, 1
    %v1346 = vadd.f32 %v1344, %v1345
    %v1347 = vmul.f32 %v1346, 0.0625
    %v1348 = vmul.f32 %v1336, %v1336
    %v1349 = vmul.f32 %v1338, %v1338
    %v1350 = vadd.f32 %v1348, %v1349
    %v1351 = vrot.slane %v1350, 4
    %v1352 = vadd.f32 %v1350, %v1351
    %v1353 = vrot.slane %v1352, 2
    %v1354 = vadd.f32 %v1352, %v1353
    %v1355 = vrot.slane %v1354, 1
    %v1356 = vadd.f32 %v1354, %v1355
    %v1357 = vmul.f32 %v1356, 0.0625
    %v1358 = vmul.f32 %v1347, %v1347
    %v1359 = vsub.f32 %v1357, %v1358
    %v1360 = vmax.f32 %v1359, 0.0
    %v1361 = vadd.f32 %v1360, 1e-05
    %v1362 = vrsqrt.pop %v1361
    %v1363 = vmul.f32 %v1362, %v1361
    %v1364 = vmul.f32 %v1363, %v1362
    %v1365 = vmul.f32 0.5, %v1364
    %v1366 = vsub.f32 1.5, %v1365
    %v1367 = vmul.f32 %v1362, %v1366
    %vm1368 = vweird.f32 %v1361
    %vm1369 = vweird.f32 %v1362
    %vm1370 = vmor %vm1368, %vm1369
    %v1371 = vsel %vm1370, %v1362, %v1367
    %v1372 = vmul.f32 %v1182, %v1371
    %v1373 = vmul.f32 %v1347, %v1372
    %v1374 = vsub.f32 %v1183, %v1373
    %v1375 = vperm.slane %v1372, 0
    %v1376 = vmul.f32 %v1336, %v1375
    %v1377 = vmul.f32 %v1338, %v1375
    %v1378 = vperm.slane %v1374, 0
    %v1379 = vadd.f32 %v1376, %v1378
    %v1380 = vadd.f32 %v1377, %v1378
    %v1381 = vmax.f32 %v1379, 0.0
    %v1382 = vmax.f32 %v1380, 0.0
    %v1383 = vpack.c.bf16 %v1382, %v1381
    %v1384 = vld [vmem:[#allocation11 + $0xe] sm:$0x1]
    %v1385 = vld [vmem:[#allocation10] sm:$0xf]
    %v1386 = vld [vmem:[#allocation10 + $0x4] sm:$0xf]
    %v1387 = vld [vmem:[#allocation10 + $0x8] sm:$0xf]
    %v1388 = vld [vmem:[#allocation10 + $0xc] sm:$0xf]
    %v1389 = vld [vmem:[#allocation10 + $0x10] sm:$0xf]
    %v1390 = vld [vmem:[#allocation10 + $0x14] sm:$0xf]
    %v1391 = vld [vmem:[#allocation10 + $0x18] sm:$0xf]
    %v1392 = vld [vmem:[#allocation10 + $0x1c] sm:$0xf]
    %v1393 = vld [vmem:[#allocation10 + $0x20] sm:$0xf]
    %v1394 = vld [vmem:[#allocation10 + $0x24] sm:$0xf]
    %v1395 = vld [vmem:[#allocation10 + $0x28] sm:$0xf]
    %v1396 = vld [vmem:[#allocation10 + $0x2c] sm:$0xf]
    %v1397 = vld [vmem:[#allocation10 + $0x30] sm:$0xf]
    %v1398 = vld [vmem:[#allocation10 + $0x34] sm:$0xf]
    %v1399 = vld [vmem:[#allocation10 + $0x38] sm:$0xf]
    %v1400 = vld [vmem:[#allocation10 + $0x3c] sm:$0xf]
    %v1401 = vperm.slane %v1384, 0
    %v1418 = vunpack.c.l.b16 %v1385
    %v1419 = vunpack.c.l.b16 %v1386
    %v1420 = vunpack.c.l.b16 %v1387
    %v1421 = vunpack.c.l.b16 %v1388
    %v1422 = vunpack.c.l.b16 %v1389
    %v1423 = vunpack.c.l.b16 %v1390
    %v1424 = vunpack.c.l.b16 %v1391
    %v1425 = vunpack.c.l.b16 %v1392
    %v1426 = vunpack.c.l.b16 %v1393
    %v1427 = vunpack.c.l.b16 %v1394
    %v1428 = vunpack.c.l.b16 %v1395
    %v1429 = vunpack.c.l.b16 %v1396
    %v1430 = vunpack.c.l.b16 %v1397
    %v1431 = vunpack.c.l.b16 %v1398
    %v1432 = vunpack.c.l.b16 %v1399
    %v1433 = vunpack.c.l.b16 %v1400
    %v1434 = vpack.c.b16 %v1419, %v1418
    %v1435 = vpack.c.b16 %v1421, %v1420
    %v1436 = vpack.c.b16 %v1423, %v1422
    %v1437 = vpack.c.b16 %v1425, %v1424
    %v1438 = vpack.c.b16 %v1427, %v1426
    %v1439 = vpack.c.b16 %v1429, %v1428
    %v1440 = vpack.c.b16 %v1431, %v1430
    %v1441 = vpack.c.b16 %v1433, %v1432
    %1450 = vmatpush.bf16.msra.mxu0 %v1441
    %1451 = vmatpush.bf16.msra.mxu0 %v1440
    %1452 = vmatpush.bf16.msra.mxu0 %v1439
    %1453 = vmatpush.bf16.msra.mxu0 %v1438
    %1454 = vmatpush.bf16.msra.mxu0 %v1437
    %1455 = vmatpush.bf16.msra.mxu0 %v1436
    %1456 = vmatpush.bf16.msra.mxu0 %v1435
    %1457 = vmatpush.bf16.msra.mxu0 %v1434
    %1458 = vmatmul.bf16.gmra.mxu0 %v1383
    %v1459 = vpop.f32.mrf.mxu0
    %v1460 = vadd.f32 %v1401, %v1459
    %v1461 = vpop.f32.mrf.mxu0
    %v1462 = vadd.f32 %v1401, %v1461
    %1463 = vdwg.mxu0
    %1464 = vst [vmem:[#allocation13] sm:$0xff] %v1460
    %1465 = vst [vmem:[#allocation13 + $0x8] sm:$0xff] %v1462
    // Predicated region
    $region50: #{tpu_custom_call.1} parent=1 // pred_check
      _
    $region51: #{tpu_custom_call.1} parent=1 // pred_check_branch
      %1467 = sbr.rel (0) target = $region53
    $region52: #{tpu_custom_call.1} parent=1 // pred_region
      %1469 = vsyncadd [#allocation4], 0
      %s1470 = sshll.u32 [#allocation13], 4
      %s1471 = int_to_ptr.vmem [resolvable:$true] %s1470
      %s1472 = sshll.u32 %s6, 4
      %s1473 = int_to_ptr.hbm [resolvable:$true] %s1472
      %1478 = dma.vmem_to_hbm [thread:$0]  %s1471, 256, %s1473, [#allocation4], 128, 128, 8
    $region53: #{tpu_custom_call.1} parent=1 // pred_fallthru
      _
    // Predicated region
    $region54: #{tpu_custom_call.1} parent=1 // pred_check
      _
    $region55: #{tpu_custom_call.1} parent=1 // pred_check_branch
      %1480 = sbr.rel (0) target = $region57
    $region56: #{tpu_custom_call.1} parent=1 // pred_region
      %1482 = dma.done [#allocation4], 256
    $region57: #{tpu_custom_call.1} parent=1 // pred_fallthru
      _
    %1483 = vsyncpa [#allocation3], 1
    %1484 = vsyncpa [#allocation6], 1
    %1485 = vsyncpa [#allocation9], 1
    %1486 = vsyncpa [#allocation12], 1
    %1487 = vsyncpa [#allocation4], 1

</llo_original>
